<compile_context>
chip_gen: v5e
topology: v5e:2x2
jax: 0.10.0
libtpu: 0.0.40
codegen_flags: <defaults>
</compile_context>

<pallas_src>
import jax
import jax.numpy as jnp
from jax.experimental import pallas as pl
from jax.experimental.pallas import tpu as pltpu


def _split_batch(total, chunk):
    """Static list of (start, size) covering [0, total) in steps of `chunk`."""
    spans = []
    b0 = 0
    while b0 < total:
        cb = min(chunk, total - b0)
        spans.append((b0, cb))
        b0 += cb
    return spans


def _make_prepend_tokens_kernel(S, T, x_chunks, tok_chunks):
    """Build a DMA-only kernel for the given static batch chunking."""
    n_x = len(x_chunks)

    def kernel(tok_ref, x_hbm, out_hbm, tok_bcast, sem):
        # tok_ref:   (1, T, D)    VMEM (small learnable parameter)
        # x_hbm:     (B, S, D)    HBM  (memory_space=pl.ANY, no auto-copy)
        # out_hbm:   (B, T+S, D)  HBM  (written only via DMA)
        # tok_bcast: (Bc, T, D)   VMEM staging buffer for broadcast tokens
        # sem:       (n_x + n_t,) DMA semaphores, one per in-flight DMA
        copies = []

        # 1) Bulk of the bytes: x -> out[:, T:, :] as K concurrent,
        #    disjoint, batch-chunked strided HBM->HBM DMAs.
        for i, (b0, cb) in enumerate(x_chunks):
            cp = pltpu.make_async_copy(
                x_hbm.at[pl.ds(b0, cb), :, :],
                out_hbm.at[pl.ds(b0, cb), pl.ds(T, S), :],
                sem.at[i],
            )
            cp.start()
            copies.append(cp)

        # 2) Class tokens: broadcast (1, T, D) -> (Bc, T, D) once in VMEM
        #    (overlaps with the in-flight bulk DMAs), then one strided
        #    VMEM->HBM DMA per batch chunk into out[:, :T, :].
        tok_bcast[...] = jnp.broadcast_to(tok_ref[...], tok_bcast.shape)
        for j, (b0, cb) in enumerate(tok_chunks):
            cp = pltpu.make_async_copy(
                tok_bcast.at[pl.ds(0, cb), :, :],
                out_hbm.at[pl.ds(b0, cb), pl.ds(0, T), :],
                sem.at[n_x + j],
            )
            cp.start()
            copies.append(cp)

        # All DMAs are in flight; now drain them.
        for cp in copies:
            cp.wait()

    return kernel


def vit_class_tokens_forward(x, tokens, num_tokens, *,
                             x_dma_streams=8, tok_batch_chunk=128):
    """Equivalent of VitClassTokens.forward.

    x:      (B, S, D) array
    tokens: (1, num_tokens, D) array or None (when num_tokens == 0)
    """
    if num_tokens == 0:
        return x

    assert x.ndim == 3
    B, S, D = x.shape
    T = num_tokens
    assert tokens.shape == (1, T, D)

    # Static batch chunking (trace-time Python): K concurrent bulk DMAs,
    # token writes in chunks of at most `tok_batch_chunk` rows.
    k = max(1, min(x_dma_streams, B))
    x_chunks = _split_batch(B, pl.cdiv(B, k))
    bc = max(1, min(tok_batch_chunk, B))
    tok_chunks = _split_batch(B, bc)

    kernel = _make_prepend_tokens_kernel(S, T, x_chunks, tok_chunks)
    n_sems = len(x_chunks) + len(tok_chunks)

    out_shape = jax.ShapeDtypeStruct((B, T + S, D), x.dtype)
    return pl.pallas_call(
        kernel,
        out_shape=out_shape,
        in_specs=[
            # tokens: tiny parameter, keep the whole array in VMEM.
            pl.BlockSpec(memory_space=pltpu.MemorySpace.VMEM),
            # x: leave in HBM; copied only with explicit strided DMAs.
            pl.BlockSpec(memory_space=pl.ANY),
        ],
        out_specs=pl.BlockSpec(memory_space=pl.ANY),
        scratch_shapes=[
            pltpu.VMEM((bc, T, D), x.dtype),     # bounded token staging buffer
            pltpu.SemaphoreType.DMA((n_sems,)),  # one sem per in-flight DMA
        ],
        # Output is written only via DMA through a pl.ANY ref; cheap insurance
        # against DCE when embedded in larger programs.
        compiler_params=pltpu.CompilerParams(has_side_effects=True),
    )(tokens.astype(x.dtype), x)


def vit_class_tokens_split(x, num_tokens):
    """Equivalent of VitClassTokens.split (pure slicing, no kernel needed)."""
    if num_tokens == 0:
        return (None, x)
    assert x.ndim == 3
    return (x[:, :num_tokens], x[:, num_tokens:])


if __name__ == "__main__":
    # Small shapes consistent with the module: batch=2, seq=8, hidden=128.
    B, S, D = 2, 8, 128
    num_tokens = 1

    key = jax.random.PRNGKey(0)
    k_tok, k_x = jax.random.split(key)

    # Deterministic parameter init matching nn.init.normal_(std=0.02).
    tokens = 0.02 * jax.random.normal(k_tok, (1, num_tokens, D), dtype=jnp.float32)
    x = jax.random.normal(k_x, (B, S, D), dtype=jnp.float32)

    out = vit_class_tokens_forward(x, tokens, num_tokens)
    out = jax.block_until_ready(out)

    # Reference check (plain JAX).
    ref = jnp.concatenate([jnp.broadcast_to(tokens, (B, num_tokens, D)), x], axis=1)
    assert out.shape == (B, num_tokens + S, D)
    assert jnp.allclose(out, ref), "mismatch vs reference"

    # Also exercise the split round-trip.
    cls_tok, patch_tok = vit_class_tokens_split(out, num_tokens)
    assert jnp.allclose(patch_tok, x)
    assert jnp.allclose(cls_tok, jnp.broadcast_to(tokens, (B, num_tokens, D)))

    # num_tokens == 0 early-return path.
    assert vit_class_tokens_forward(x, None, 0) is x

    print("KERNEL_OK")
</pallas_src>

<mosaic_0001>
module attributes {stable_mosaic.version = 11 : i64} {
  func.func @kernel(%arg0: memref<1x1x128xf32, #tpu.memory_space<vmem>>, %arg1: memref<2x8x128xf32, #tpu.memory_space<any>>, %arg2: memref<2x9x128xf32, #tpu.memory_space<any>>, %arg3: memref<2x1x128xf32, #tpu.memory_space<vmem>>, %arg4: memref<3x!tpu.dma_semaphore, #tpu.memory_space<semaphore_mem>>) attributes {dimension_semantics = [], scalar_prefetch = 0 : i64, scratch_operands = 2 : i64, tpu.core_type = #tpu.core_type<tc>} {
    %c0_i32 = arith.constant 0 : i32
    %c0_i32_0 = arith.constant 0 : i32
    %c0_i32_1 = arith.constant 0 : i32
    %c0_i32_2 = arith.constant 0 : i32
    %0 = tpu.memref_slice %arg1[%c0_i32_0, %c0_i32_1, %c0_i32_2] : memref<2x8x128xf32, #tpu.memory_space<any>> -> memref<1x8x128xf32, #tpu.memory_space<any>>
    %c0_i32_3 = arith.constant 0 : i32
    %c1_i32 = arith.constant 1 : i32
    %c0_i32_4 = arith.constant 0 : i32
    %1 = tpu.memref_slice %arg2[%c0_i32_3, %c1_i32, %c0_i32_4] : memref<2x9x128xf32, #tpu.memory_space<any>> -> memref<1x8x128xf32, #tpu.memory_space<any>>
    %2 = tpu.memref_slice %arg4[%c0_i32] : memref<3x!tpu.dma_semaphore, #tpu.memory_space<semaphore_mem>> -> memref<1x!tpu.dma_semaphore, #tpu.memory_space<semaphore_mem>>
    %3 = tpu.memref_squeeze %2 : memref<1x!tpu.dma_semaphore, #tpu.memory_space<semaphore_mem>> -> memref<!tpu.dma_semaphore, #tpu.memory_space<semaphore_mem>>
    tpu.enqueue_dma source(%0 : memref<1x8x128xf32, #tpu.memory_space<any>>) target(%1 : memref<1x8x128xf32, #tpu.memory_space<any>>) target_semaphore(%3 : memref<!tpu.dma_semaphore, #tpu.memory_space<semaphore_mem>>)
    %c1_i32_5 = arith.constant 1 : i32
    %c1_i32_6 = arith.constant 1 : i32
    %c0_i32_7 = arith.constant 0 : i32
    %c0_i32_8 = arith.constant 0 : i32
    %4 = tpu.memref_slice %arg1[%c1_i32_6, %c0_i32_7, %c0_i32_8] : memref<2x8x128xf32, #tpu.memory_space<any>> -> memref<1x8x128xf32, #tpu.memory_space<any>>
    %c1_i32_9 = arith.constant 1 : i32
    %c1_i32_10 = arith.constant 1 : i32
    %c0_i32_11 = arith.constant 0 : i32
    %5 = tpu.memref_slice %arg2[%c1_i32_9, %c1_i32_10, %c0_i32_11] : memref<2x9x128xf32, #tpu.memory_space<any>> -> memref<1x8x128xf32, #tpu.memory_space<any>>
    %6 = tpu.memref_slice %arg4[%c1_i32_5] : memref<3x!tpu.dma_semaphore, #tpu.memory_space<semaphore_mem>> -> memref<1x!tpu.dma_semaphore, #tpu.memory_space<semaphore_mem>>
    %7 = tpu.memref_squeeze %6 : memref<1x!tpu.dma_semaphore, #tpu.memory_space<semaphore_mem>> -> memref<!tpu.dma_semaphore, #tpu.memory_space<semaphore_mem>>
    tpu.enqueue_dma source(%4 : memref<1x8x128xf32, #tpu.memory_space<any>>) target(%5 : memref<1x8x128xf32, #tpu.memory_space<any>>) target_semaphore(%7 : memref<!tpu.dma_semaphore, #tpu.memory_space<semaphore_mem>>)
    %c0 = arith.constant 0 : index
    %c0_12 = arith.constant 0 : index
    %c0_13 = arith.constant 0 : index
    %8 = vector.load %arg0[%c0, %c0_12, %c0_13] : memref<1x1x128xf32, #tpu.memory_space<vmem>>, vector<1x1x128xf32>
    %9 = vector.shape_cast %8 : vector<1x1x128xf32> to vector<1x1x128xf32>
    %10 = vector.broadcast %9 : vector<1x1x128xf32> to vector<2x1x128xf32>
    %c0_14 = arith.constant 0 : index
    %c0_15 = arith.constant 0 : index
    %c0_16 = arith.constant 0 : index
    %11 = vector.load %arg3[%c0_14, %c0_15, %c0_16] : memref<2x1x128xf32, #tpu.memory_space<vmem>>, vector<2x1x128xf32>
    tpu.vector_store %arg3[%c0_14, %c0_15, %c0_16], %10 {strides = array<i32>} : memref<2x1x128xf32, #tpu.memory_space<vmem>>, vector<2x1x128xf32>,
    %c2_i32 = arith.constant 2 : i32
    %c0_i32_17 = arith.constant 0 : i32
    %c0_i32_18 = arith.constant 0 : i32
    %c0_i32_19 = arith.constant 0 : i32
    %12 = tpu.memref_slice %arg3[%c0_i32_17, %c0_i32_18, %c0_i32_19] : memref<2x1x128xf32, #tpu.memory_space<vmem>> -> memref<2x1x128xf32, #tpu.memory_space<vmem>>
    %c0_i32_20 = arith.constant 0 : i32
    %c0_i32_21 = arith.constant 0 : i32
    %c0_i32_22 = arith.constant 0 : i32
    %13 = tpu.memref_slice %arg2[%c0_i32_20, %c0_i32_21, %c0_i32_22] : memref<2x9x128xf32, #tpu.memory_space<any>> -> memref<2x1x128xf32, #tpu.memory_space<any>>
    %14 = tpu.memref_slice %arg4[%c2_i32] : memref<3x!tpu.dma_semaphore, #tpu.memory_space<semaphore_mem>> -> memref<1x!tpu.dma_semaphore, #tpu.memory_space<semaphore_mem>>
    %15 = tpu.memref_squeeze %14 : memref<1x!tpu.dma_semaphore, #tpu.memory_space<semaphore_mem>> -> memref<!tpu.dma_semaphore, #tpu.memory_space<semaphore_mem>>
    tpu.enqueue_dma source(%12 : memref<2x1x128xf32, #tpu.memory_space<vmem>>) target(%13 : memref<2x1x128xf32, #tpu.memory_space<any>>) target_semaphore(%15 : memref<!tpu.dma_semaphore, #tpu.memory_space<semaphore_mem>>)
    %c0_i32_23 = arith.constant 0 : i32
    %c0_i32_24 = arith.constant 0 : i32
    %c0_i32_25 = arith.constant 0 : i32
    %c0_i32_26 = arith.constant 0 : i32
    %16 = tpu.memref_slice %arg1[%c0_i32_24, %c0_i32_25, %c0_i32_26] : memref<2x8x128xf32, #tpu.memory_space<any>> -> memref<1x8x128xf32, #tpu.memory_space<any>>
    %c0_i32_27 = arith.constant 0 : i32
    %c1_i32_28 = arith.constant 1 : i32
    %c0_i32_29 = arith.constant 0 : i32
    %17 = tpu.memref_slice %arg2[%c0_i32_27, %c1_i32_28, %c0_i32_29] : memref<2x9x128xf32, #tpu.memory_space<any>> -> memref<1x8x128xf32, #tpu.memory_space<any>>
    %18 = tpu.memref_slice %arg4[%c0_i32_23] : memref<3x!tpu.dma_semaphore, #tpu.memory_space<semaphore_mem>> -> memref<1x!tpu.dma_semaphore, #tpu.memory_space<semaphore_mem>>
    %19 = tpu.memref_squeeze %18 : memref<1x!tpu.dma_semaphore, #tpu.memory_space<semaphore_mem>> -> memref<!tpu.dma_semaphore, #tpu.memory_space<semaphore_mem>>
    tpu.wait_dma2 semaphore(%19 : memref<!tpu.dma_semaphore, #tpu.memory_space<semaphore_mem>>) src(%16 : memref<1x8x128xf32, #tpu.memory_space<any>>) dst(%17 : memref<1x8x128xf32, #tpu.memory_space<any>>)
    %c1_i32_30 = arith.constant 1 : i32
    %c1_i32_31 = arith.constant 1 : i32
    %c0_i32_32 = arith.constant 0 : i32
    %c0_i32_33 = arith.constant 0 : i32
    %20 = tpu.memref_slice %arg1[%c1_i32_31, %c0_i32_32, %c0_i32_33] : memref<2x8x128xf32, #tpu.memory_space<any>> -> memref<1x8x128xf32, #tpu.memory_space<any>>
    %c1_i32_34 = arith.constant 1 : i32
    %c1_i32_35 = arith.constant 1 : i32
    %c0_i32_36 = arith.constant 0 : i32
    %21 = tpu.memref_slice %arg2[%c1_i32_34, %c1_i32_35, %c0_i32_36] : memref<2x9x128xf32, #tpu.memory_space<any>> -> memref<1x8x128xf32, #tpu.memory_space<any>>
    %22 = tpu.memref_slice %arg4[%c1_i32_30] : memref<3x!tpu.dma_semaphore, #tpu.memory_space<semaphore_mem>> -> memref<1x!tpu.dma_semaphore, #tpu.memory_space<semaphore_mem>>
    %23 = tpu.memref_squeeze %22 : memref<1x!tpu.dma_semaphore, #tpu.memory_space<semaphore_mem>> -> memref<!tpu.dma_semaphore, #tpu.memory_space<semaphore_mem>>
    tpu.wait_dma2 semaphore(%23 : memref<!tpu.dma_semaphore, #tpu.memory_space<semaphore_mem>>) src(%20 : memref<1x8x128xf32, #tpu.memory_space<any>>) dst(%21 : memref<1x8x128xf32, #tpu.memory_space<any>>)
    %c2_i32_37 = arith.constant 2 : i32
    %c0_i32_38 = arith.constant 0 : i32
    %c0_i32_39 = arith.constant 0 : i32
    %c0_i32_40 = arith.constant 0 : i32
    %24 = tpu.memref_slice %arg3[%c0_i32_38, %c0_i32_39, %c0_i32_40] : memref<2x1x128xf32, #tpu.memory_space<vmem>> -> memref<2x1x128xf32, #tpu.memory_space<vmem>>
    %c0_i32_41 = arith.constant 0 : i32
    %c0_i32_42 = arith.constant 0 : i32
    %c0_i32_43 = arith.constant 0 : i32
    %25 = tpu.memref_slice %arg2[%c0_i32_41, %c0_i32_42, %c0_i32_43] : memref<2x9x128xf32, #tpu.memory_space<any>> -> memref<2x1x128xf32, #tpu.memory_space<any>>
    %26 = tpu.memref_slice %arg4[%c2_i32_37] : memref<3x!tpu.dma_semaphore, #tpu.memory_space<semaphore_mem>> -> memref<1x!tpu.dma_semaphore, #tpu.memory_space<semaphore_mem>>
    %27 = tpu.memref_squeeze %26 : memref<1x!tpu.dma_semaphore, #tpu.memory_space<semaphore_mem>> -> memref<!tpu.dma_semaphore, #tpu.memory_space<semaphore_mem>>
    tpu.wait_dma2 semaphore(%27 : memref<!tpu.dma_semaphore, #tpu.memory_space<semaphore_mem>>) src(%24 : memref<2x1x128xf32, #tpu.memory_space<vmem>>) dst(%25 : memref<2x1x128xf32, #tpu.memory_space<any>>)
    return
  }
}

</mosaic_0001>

<llo_original>
// kernel: tpu_custom_call.1
$region0: #{tpu_custom_call.1}
  #allocation0 [shape = 'u32[]', space=smem, size = 0x4, offset = 0x4, fixed_abs, tag = 'smem constant byte address 0x4 - core index']
  #allocation1 [shape = 'u32[72,128]{1,0:T(1,128)}', space=vmem, size = 0x9000, scoped, tag = 'internal scratch']
  #allocation2 [shape = 'f32[2,1,128]{2,1,0:T(1,128)}', space=vmem, size = 0x400, scoped, tag = 'scratch operand']
  #allocation3 [shape = 's32[3]{0}', space=sflag, size = 0xc, scoped, tag = 'scratch operand']
  #allocation6 [shape = 's32[]', space=sflag, size = 0x4, offset = 0, fixed_abs, tag = 'sflag constant byte address 0x0 - dummy sync flag']
  #allocation7 [shape = 's32[]', space=sflag, size = 0x4, offset = 0, fixed_abs, tag = 'sflag constant byte address 0x0 - dummy sync flag']
  #allocation8 [shape = 'u32[]', space=smem, size = 0x4, offset = 0x44, fixed_abs, tag = 'smem constant byte address 0x44 - assertion arg 0']
  #allocation9 [shape = 'u32[]', space=smem, size = 0x4, offset = 0x48, fixed_abs, tag = 'smem constant byte address 0x48 - assertion arg 1']
  #allocation10 [shape = 's32[]', space=sflag, size = 0x4, offset = 0, fixed_abs, tag = 'sflag constant byte address 0x0 - dummy sync flag']
  #allocation11 [shape = 's32[]', space=sflag, size = 0x4, offset = 0, fixed_abs, tag = 'sflag constant byte address 0x0 - dummy sync flag']
  #allocation12 [shape = 's32[]', space=sflag, size = 0x4, offset = 0, fixed_abs, tag = 'sflag constant byte address 0x0 - dummy sync flag']
  %s0 = inlined_call_operand.hbm [shape: f32[1,1,128], index: 0, kind: input, shape index: {}]
  %s1 = inlined_call_operand.hbm [shape: f32[2,8,128], index: 1, kind: input, shape index: {}]
  %s2 = inlined_call_operand.vmem [shape: f32[2,9,128], index: 2, kind: output, shape index: {}]
  %s3 = sld [smem:[#allocation0]]
  $region48: #{tpu_custom_call.1} parent=0
    _
  %s5 = ssub.s32 1, %s3
  %s6 = scalar_select 0, %s5, %s3
  $region1: #{tpu_custom_call.1} parent=0
    #allocation4 [shape = 'u8[512]{0}', space=vmem, size = 0x400, scoped, tag = 'input window, operand 0, single buffered']
    #allocation5 [shape = 's32[1]{0}', space=sflag, size = 0x4, scoped, tag = 'scoped memory for tpu_custom_call.1']
    %7 = vsyncpa [#allocation5], 0
    // Predicated region
    $region2: #{tpu_custom_call.1} parent=1 // pred_check
      _
    $region3: #{tpu_custom_call.1} parent=1 // pred_check_branch
      %9 = sbr.rel (0) target = $region5
    $region4: #{tpu_custom_call.1} parent=1 // pred_region
      %11 = vsyncadd [#allocation5], 0
      %s13 = sshll.u32 %s0, 4
      %s14 = int_to_ptr.hbm [resolvable:$true] %s13
      %s15 = sshll.u32 [#allocation4], 4
      %s16 = int_to_ptr.vmem [resolvable:$true] %s15
      %18 = dma.hbm_to_vmem [thread:$0]  %s14, 16, %s16, [#allocation5]
    $region5: #{tpu_custom_call.1} parent=1 // pred_fallthru
      _
    // Predicated region
    $region6: #{tpu_custom_call.1} parent=1 // pred_check
      _
    $region7: #{tpu_custom_call.1} parent=1 // pred_check_branch
      %20 = sbr.rel (0) target = $region9
    $region8: #{tpu_custom_call.1} parent=1 // pred_region
      %22 = dma.done [#allocation5], 16
    $region9: #{tpu_custom_call.1} parent=1 // pred_fallthru
      _
    %s23 = scalar_lea.vmem %s2, 1
    // Predicated region
    $region10: #{tpu_custom_call.1} parent=1 // pred_check
      _
    $region11: #{tpu_custom_call.1} parent=1 // pred_check_branch
      %25 = sbr.rel target = $region13
    $region12: #{tpu_custom_call.1} parent=1 // pred_region
      %26 = sst [smem:[#allocation8]] [#allocation7]
      %27 = sst [smem:[#allocation9]] [#allocation6]
    $region13: #{tpu_custom_call.1} parent=1 // pred_fallthru
      _
    %29 = shalt.err (0)
    %s31 = sshll.u32 %s1, 4
    %s32 = int_to_ptr.hbm [resolvable:$true] %s31
    %s33 = sshll.u32 %s23, 4
    %s34 = int_to_ptr.vmem [resolvable:$true] %s33
    %36 = dma.hbm_to_vmem [thread:$0]  %s32, 128, %s34, [#allocation3]
    %s37 = scalar_lea.hbm %s1, 8
    %s38 = scalar_lea.vmem %s2, 17
    %s39 = scalar_lea.sflag [#allocation3], 1
    // Predicated region
    $region14: #{tpu_custom_call.1} parent=1 // pred_check
      _
    $region15: #{tpu_custom_call.1} parent=1 // pred_check_branch
      %41 = sbr.rel target = $region17
    $region16: #{tpu_custom_call.1} parent=1 // pred_region
      %42 = sst [smem:[#allocation8]] [#allocation11]
      %43 = sst [smem:[#allocation9]] [#allocation10]
    $region17: #{tpu_custom_call.1} parent=1 // pred_fallthru
      _
    %45 = shalt.err (0)
    %s47 = sshll.u32 %s37, 4
    %s48 = int_to_ptr.hbm [resolvable:$true] %s47
    %s49 = sshll.u32 %s38, 4
    %s50 = int_to_ptr.vmem [resolvable:$true] %s49
    %52 = dma.hbm_to_vmem [thread:$0]  %s48, 128, %s50, %s39
    %v53 = vld [vmem:[#allocation4] sm:$0x1]
    %54 = vst [vmem:[#allocation2] sm:$0x1] %v53
    %55 = vst [vmem:[#allocation2 + $0x1] sm:$0x1] %v53
    %s56 = scalar_lea.sflag [#allocation3], 2
    // Predicated region
    $region18: #{tpu_custom_call.1} parent=1 // pred_check
      _
    $region19: #{tpu_custom_call.1} parent=1 // pred_check_branch
      %58 = sbr.rel target = $region21
    $region20: #{tpu_custom_call.1} parent=1 // pred_region
      // Predicated region
      $region33: #{tpu_custom_call.1} parent=20 // pred_check
        _
      $region34: #{tpu_custom_call.1} parent=20 // pred_check_branch
        %76 = sbr.rel (0) target = $region36
      $region35: #{tpu_custom_call.1} parent=20 // pred_region
        %s78 = ssub.s32 2, 1
        loop: start=0, step=1, limit=1
        $region37: #{tpu_custom_call.1} parent=35 // loop_pre_header
          _
        $region38: #{tpu_custom_call.1} parent=35 // loop_header
          %s80 = sphi 0, %s84
          %p81 = scmp.ge.s32.totalorder %s80, 1
          %s85 = sphi [#allocation2], [#allocation2]
          %s86 = sphi %s2, %s2
        $region39: #{tpu_custom_call.1} parent=35 // loop_header_branch
          %83 = sbr.rel (%p81) target = $region43
        $region40: #{tpu_custom_call.1} parent=35 // loop_body
          %v87 = vld [vmem:[%s85] sm:%s78]
          %88 = vst [vmem:[%s86] sm:%s78] %v87
          %v89 = vld [vmem:[%s85 + $0x1] sm:%s78]
          %90 = vst [vmem:[%s86 + $0x10] sm:%s78] %v89
        $region41: #{tpu_custom_call.1} parent=35 // loop_footer
          %s84 = sadd.s32 1, %s80
        $region42: #{tpu_custom_call.1} parent=35 // loop_footer_branch
          %79 = sbr.rel target = $region38
        $region43: #{tpu_custom_call.1} parent=35 // loop_exit
          _
      $region36: #{tpu_custom_call.1} parent=20 // pred_fallthru
        _
    $region21: #{tpu_custom_call.1} parent=1 // pred_fallthru
      _
    // Predicated region
    $region22: #{tpu_custom_call.1} parent=1 // pred_check
      _
    $region23: #{tpu_custom_call.1} parent=1 // pred_check_branch
      %60 = sbr.rel (0) target = $region25
    $region24: #{tpu_custom_call.1} parent=1 // pred_region
      %s62 = ssub.s32 2, 1
      loop: start=0, step=1, limit=1
      $region26: #{tpu_custom_call.1} parent=24 // loop_pre_header
        _
      $region27: #{tpu_custom_call.1} parent=24 // loop_header
        %s64 = sphi 0, %s68
        %p65 = scmp.ge.s32.totalorder %s64, 1
        %s69 = sphi [#allocation2], [#allocation2]
        %s70 = sphi %s2, %s2
      $region28: #{tpu_custom_call.1} parent=24 // loop_header_branch
        %67 = sbr.rel (%p65) target = $region32
      $region29: #{tpu_custom_call.1} parent=24 // loop_body
        %v71 = vld [vmem:[%s69] sm:%s62]
        %72 = vst [vmem:[%s70] sm:%s62] %v71
        %v73 = vld [vmem:[%s69 + $0x1] sm:%s62]
        %74 = vst [vmem:[%s70 + $0x10] sm:%s62] %v73
      $region30: #{tpu_custom_call.1} parent=24 // loop_footer
        %s68 = sadd.s32 1, %s64
      $region31: #{tpu_custom_call.1} parent=24 // loop_footer_branch
        %63 = sbr.rel target = $region27
      $region32: #{tpu_custom_call.1} parent=24 // loop_exit
        _
    $region25: #{tpu_custom_call.1} parent=1 // pred_fallthru
      _
    // Predicated region
    $region44: #{tpu_custom_call.1} parent=1 // pred_check
      _
    $region45: #{tpu_custom_call.1} parent=1 // pred_check_branch
      %93 = sbr.rel (0) target = $region47
    $region46: #{tpu_custom_call.1} parent=1 // pred_region
      %94 = vsyncadd %s56, 32
    $region47: #{tpu_custom_call.1} parent=1 // pred_fallthru
      _
    %s95 = smul.u32 1, 8
    %s96 = smul.u32 %s95, 1
    %s97 = sshll.u32 %s96, 4
    %98 = dma.done [#allocation3], %s97
    %s99 = sshll.u32 %s96, 4
    %100 = dma.done %s39, %s99
    %s101 = smul.u32 2, 1
    %s102 = smul.u32 %s101, 1
    %s103 = sshll.u32 %s102, 4
    %104 = dma.done %s56, %s103
    %105 = vsyncpa [#allocation5], 1
  %106 = vsyncmov [#allocation3]
  %s107 = vpop.sfrf %106
  %p108 = scmp.eq.s32.totalorder %s107, 0
  %p109 = pneg %p108
  %111 = shalt.err (%p109)
  %s112 = scalar_lea.sflag [#allocation3], 1
  %113 = vsyncmov %s112
  %s114 = vpop.sfrf %113
  %p115 = scmp.eq.s32.totalorder %s114, 0
  %p116 = pneg %p115
  %118 = shalt.err (%p116)
  %s119 = scalar_lea.sflag [#allocation3], 2
  %120 = vsyncmov %s119
  %s121 = vpop.sfrf %120
  %p122 = scmp.eq.s32.totalorder %s121, 0
  %p123 = pneg %p122
  %125 = shalt.err (%p123)

</llo_original>
